<compile_context>
chip_gen: v5e
topology: v5e:2x2
jax: 0.10.0
libtpu: 0.0.40
codegen_flags: <defaults>
</compile_context>

<pallas_src>
import jax
import jax.numpy as jnp
from jax.experimental import pallas as pl
from jax.experimental.pallas import tpu as pltpu

_LANE = 128
_SUBLANE = 8


def _rup(x, m):
    return -(-int(x) // m) * m


def _block_diag(w, g):
    """g copies of w on the block diagonal: (d_in, d_out) -> (g*d_in, g*d_out)."""
    d_in, d_out = int(w.shape[0]), int(w.shape[1])
    out = jnp.zeros((g * d_in, g * d_out), w.dtype)
    for k in range(g):
        out = out.at[k * d_in:(k + 1) * d_in, k * d_out:(k + 1) * d_out].set(w)
    return out


def _pack_params(params, g):
    """Pack grouped (block-diagonal) weights and lane-tiled biases into one f32 buffer.

    Returns (packed, meta) where packed has shape (total_rows, max_out_g) and
    meta[i] = (row_off_w, row_off_b, d_in_g, d_out_g) — all static Python ints,
    with every row offset a multiple of 8 (sublane aligned).
    """
    max_out = max(g * int(w.shape[1]) for w, _ in params)
    blocks, meta, row = [], [], 0
    for w, b in params:
        d_in, d_out = int(w.shape[0]), int(w.shape[1])
        d_in_g, d_out_g = g * d_in, g * d_out
        wg = _block_diag(w.astype(jnp.float32), g)          # (d_in_g, d_out_g)
        bg = jnp.tile(b.astype(jnp.float32), g)              # (d_out_g,)
        w_rows = _rup(d_in_g, _SUBLANE)
        wp = jnp.zeros((w_rows, max_out), jnp.float32).at[:d_in_g, :d_out_g].set(wg)
        bp = jnp.zeros((_SUBLANE, max_out), jnp.float32).at[0, :d_out_g].set(bg)
        blocks.append(wp)
        blocks.append(bp)
        meta.append((row, row + w_rows, d_in_g, d_out_g))
        row += w_rows + _SUBLANE
    return jnp.concatenate(blocks, axis=0), tuple(meta)


def _make_mlp_kernel(meta):
    """Kernel computing the full (grouped) MLP forward for one batch tile."""
    n_layers = len(meta)

    def kernel(x_ref, p_ref, o_ref):
        h = x_ref[...].astype(jnp.float32)
        for i, (off_w, off_b, d_in_g, d_out_g) in enumerate(meta):
            w = p_ref[off_w:off_w + d_in_g, :d_out_g]        # static slice (d_in_g, d_out_g)
            b = p_ref[off_b:off_b + 1, :d_out_g]             # static slice (1, d_out_g)
            h = jnp.dot(h, w, preferred_element_type=jnp.float32) + b
            if i < n_layers - 1:
                h = jnp.tanh(h)                              # EUP path, overlaps MXU/DMA
        o_ref[...] = h.astype(o_ref.dtype)

    return kernel


def _vmem_budget_bytes():
    """Generation-aware usable-VMEM ceiling (3/4 of physical, <= 100 MiB).

    v5e/v6e: 128 MiB physical -> ~96 MiB; v7x: 64 MiB/TC -> 48 MiB.
    Conservative 48 MiB fallback if the query is unavailable."""
    try:
        cap = int(pltpu.get_tpu_info().vmem_capacity_bytes)
    except Exception:
        cap = 64 << 20
    return int(min(cap * 3 // 4, 100 << 20))


def mlp_pallas(x, params, *, batch_tile=None, group=None):
    """Run the fused MLP kernel.

    x: (B, dim_in) float32
    params: list of (W, b) with W of shape (in, out) and b of shape (out,)
            (i.e. the transpose of PyTorch's Linear weight layout).
    batch_tile: rows (original, ungrouped) per grid step. Default 16384; sweep
                8K-64K for very large batches.
    group: lane-packing factor g (logical rows packed per lane group). Default:
           largest g <= 8 with g * max_layer_width <= 128.
    """
    B, dim_in = x.shape
    assert dim_in == int(params[0][0].shape[0])
    dim_out = int(params[-1][0].shape[1])
    widths = [int(w.shape[1]) for w, _ in params] + [dim_in]

    # --- group factor: pack g logical rows into the lane axis -------------------
    if group is None:
        group = max(1, min(8, _LANE // max(widths)))
    g = max(1, int(group))
    dim_in_g, dim_out_g = g * dim_in, g * dim_out
    Bg = pl.cdiv(B, g)                                     # grouped rows (pre-pad)

    # --- parameters folded into one small resident buffer -----------------------
    packed, meta = _pack_params(params, g)

    # --- VMEM budgeting (lane-padded sizes) --------------------------------------
    max_w_g = g * max(widths)
    per_row = (2 * _rup(dim_in_g, _LANE)            # x tile, double-buffered
               + 2 * _rup(dim_out_g, _LANE)         # out tile, double-buffered
               + 4 * _rup(max_w_g, _LANE)) * 4      # intermediate activations headroom
    fixed = 2 * int(packed.shape[0]) * _rup(packed.shape[1], _LANE) * 4 + (1 << 20)
    budget = _vmem_budget_bytes()
    max_tb = max(_SUBLANE, ((budget // 2 - fixed) // per_row) // _SUBLANE * _SUBLANE)

    # --- batch tile (in grouped rows) --------------------------------------------
    if batch_tile is None:
        batch_tile = 16384                              # original rows per step
    tb = max(_SUBLANE, (int(batch_tile) // g) // _SUBLANE * _SUBLANE)
    tb = min(tb, max_tb)
    # keep >=8 grid steps on large inputs (v7x megacore + pipelining), but never
    # shrink below 1024 grouped rows (per-step ~0.35us overhead must stay amortized)
    tb = min(tb, max(1024, _rup(pl.cdiv(Bg, 8), _SUBLANE)))
    tb = min(tb, _rup(Bg, _SUBLANE))                    # don't exceed the problem
    tb = max(_SUBLANE, (tb // _SUBLANE) * _SUBLANE)
    # rebalance to minimize batch padding at the same step count
    n_steps = pl.cdiv(Bg, tb)
    tb = max(_SUBLANE, _rup(pl.cdiv(Bg, n_steps), _SUBLANE))
    Bg_pad = n_steps * tb
    B_pad = Bg_pad * g

    x_pad = x if B_pad == B else jnp.pad(x, ((0, B_pad - B), (0, 0)))
    x_g = x_pad.reshape(Bg_pad, dim_in_g)               # free: row-major dim merge

    vmem_est = fixed + per_row * tb
    vmem_limit = int(min(budget, max(2 * vmem_est, 8 << 20)))

    # --- advisory cost estimate ---------------------------------------------------
    flops = 2 * Bg_pad * sum(di * do for (_, _, di, do) in meta)
    transcendentals = Bg_pad * sum(do for (_, _, _, do) in meta[:-1])
    bytes_accessed = (x_g.size + Bg_pad * dim_out_g + packed.size) * 4

    out_g = pl.pallas_call(
        _make_mlp_kernel(meta),
        out_shape=jax.ShapeDtypeStruct((Bg_pad, dim_out_g), x.dtype),
        grid_spec=pltpu.PrefetchScalarGridSpec(
            num_scalar_prefetch=0,
            grid=(n_steps,),
            in_specs=[
                pl.BlockSpec((tb, dim_in_g), lambda i: (i, 0)),
                pl.BlockSpec(packed.shape, lambda i: (0, 0)),   # resident params
            ],
            out_specs=pl.BlockSpec((tb, dim_out_g), lambda i: (i, 0)),
        ),
        compiler_params=pltpu.CompilerParams(
            dimension_semantics=("parallel",),
            vmem_limit_bytes=vmem_limit,
        ),
        cost_estimate=pl.CostEstimate(
            flops=flops,
            transcendentals=transcendentals,
            bytes_accessed=bytes_accessed,
        ),
    )(x_g, packed)

    out = out_g.reshape(B_pad, dim_out)                  # free: row-major dim split
    return out if B_pad == B else out[:B]


def init_mlp_params(key, dim_in, dim_out, dim_hidden=32, num_hidden=2, sigma=0.01):
    """Deterministic init mirroring the PyTorch module:
    weight ~ Normal(0, sigma), bias ~ Uniform(-sigma, sigma)."""
    if num_hidden == 0:
        dims = [(dim_in, dim_out)]
    else:
        dims = [(dim_in, dim_hidden)]
        dims += [(dim_hidden, dim_hidden)] * (num_hidden - 1)
        dims += [(dim_hidden, dim_out)]

    params = []
    for (d_in, d_out) in dims:
        key, kw, kb = jax.random.split(key, 3)
        # Stored as (in, out): transpose of PyTorch's (out, in) Linear weight.
        w = sigma * jax.random.normal(kw, (d_in, d_out), dtype=jnp.float32)
        b = jax.random.uniform(kb, (d_out,), minval=-sigma, maxval=sigma,
                               dtype=jnp.float32)
        params.append((w, b))
    return params


def mlp_reference(x, params):
    h = x
    for i, (w, b) in enumerate(params):
        h = h @ w + b
        if i < len(params) - 1:
            h = jnp.tanh(h)
    return h


if __name__ == "__main__":
    key = jax.random.PRNGKey(0)

    # Small shapes consistent with the module defaults (dim_hidden=32, num_hidden=2).
    batch, dim_in, dim_out, dim_hidden, num_hidden = 8, 4, 3, 32, 2

    key, kx = jax.random.split(key)
    x = jax.random.normal(kx, (batch, dim_in), dtype=jnp.float32)

    params = init_mlp_params(key, dim_in, dim_out, dim_hidden, num_hidden, sigma=0.01)

    out = jax.block_until_ready(mlp_pallas(x, params))
    ref = mlp_reference(x, params)
    assert out.shape == (batch, dim_out)
    assert jnp.allclose(out, ref, atol=1e-5, rtol=1e-5), "mismatch vs reference (small batch)"

    # Larger, non-divisible batch: exercises padding + lane-grouping + multi-step grid.
    key, kx2 = jax.random.split(key)
    x2 = jax.random.normal(kx2, (1000, dim_in), dtype=jnp.float32)
    out2 = jax.block_until_ready(mlp_pallas(x2, params, batch_tile=512))
    ref2 = mlp_reference(x2, params)
    assert out2.shape == (1000, dim_out)
    assert jnp.allclose(out2, ref2, atol=1e-5, rtol=1e-5), "mismatch vs reference (tiled batch)"

    print("KERNEL_OK")
</pallas_src>

<mosaic_0001>
module attributes {stable_mosaic.version = 11 : i64} {
  func.func @kernel(%arg0: i32, %arg1: memref<8x16xf32, #tpu.memory_space<vmem>>, %arg2: memref<296x128xf32, #tpu.memory_space<vmem>>, %arg3: memref<8x12xf32, #tpu.memory_space<vmem>>) attributes {dimension_semantics = [#tpu.dimension_semantics<parallel>], iteration_bounds = array<i64: 1>, scalar_prefetch = 0 : i64, scratch_operands = 0 : i64, tpu.core_type = #tpu.core_type<tc>, window_params = [{transform_indices = @transform_0, window_bounds = array<i64: 8, 16>}, {pipeline_mode = #tpu.pipeline_mode<synchronous>, transform_indices = @transform_1, window_bounds = array<i64: 296, 128>}, {transform_indices = @transform_2, window_bounds = array<i64: 8, 12>}]} {
    %c0 = arith.constant 0 : index
    %c0_0 = arith.constant 0 : index
    %0 = vector.load %arg1[%c0, %c0_0] : memref<8x16xf32, #tpu.memory_space<vmem>>, vector<8x16xf32>
    %c0_1 = arith.constant 0 : index
    %c0_2 = arith.constant 0 : index
    %1 = vector.load %arg2[%c0_1, %c0_2] : memref<296x128xf32, #tpu.memory_space<vmem>>, vector<16x128xf32>
    %c16 = arith.constant 16 : index
    %c0_3 = arith.constant 0 : index
    %2 = vector.load %arg2[%c16, %c0_3] : memref<296x128xf32, #tpu.memory_space<vmem>>, vector<1x128xf32>
    %cst = arith.constant dense<0.000000e+00> : vector<8x128xf32>
    %3 = tpu.matmul %0, %1, %cst {dimension_numbers = #tpu.dot_dimension_numbers<[1], [0], [0], [1], [0, 0, 1, 1], [], []>} : vector<8x16xf32>, vector<16x128xf32>, vector<8x128xf32> -> vector<8x128xf32>
    %4 = vector.broadcast %2 : vector<1x128xf32> to vector<8x128xf32>
    %5 = arith.addf %3, %4 : vector<8x128xf32>
    %6 = math.tanh %5 : vector<8x128xf32>
    %c24 = arith.constant 24 : index
    %c0_4 = arith.constant 0 : index
    %7 = vector.load %arg2[%c24, %c0_4] : memref<296x128xf32, #tpu.memory_space<vmem>>, vector<128x128xf32>
    %c152 = arith.constant 152 : index
    %c0_5 = arith.constant 0 : index
    %8 = vector.load %arg2[%c152, %c0_5] : memref<296x128xf32, #tpu.memory_space<vmem>>, vector<1x128xf32>
    %cst_6 = arith.constant dense<0.000000e+00> : vector<8x128xf32>
    %9 = tpu.matmul %6, %7, %cst_6 {dimension_numbers = #tpu.dot_dimension_numbers<[1], [0], [0], [1], [0, 0, 1, 1], [], []>} : vector<8x128xf32>, vector<128x128xf32>, vector<8x128xf32> -> vector<8x128xf32>
    %10 = vector.broadcast %8 : vector<1x128xf32> to vector<8x128xf32>
    %11 = arith.addf %9, %10 : vector<8x128xf32>
    %12 = math.tanh %11 : vector<8x128xf32>
    %c160 = arith.constant 160 : index
    %c0_7 = arith.constant 0 : index
    %13 = vector.load %arg2[%c160, %c0_7] : memref<296x128xf32, #tpu.memory_space<vmem>>, vector<128x12xf32>
    %c288 = arith.constant 288 : index
    %c0_8 = arith.constant 0 : index
    %14 = vector.load %arg2[%c288, %c0_8] : memref<296x128xf32, #tpu.memory_space<vmem>>, vector<1x12xf32>
    %cst_9 = arith.constant dense<0.000000e+00> : vector<8x12xf32>
    %15 = tpu.matmul %12, %13, %cst_9 {dimension_numbers = #tpu.dot_dimension_numbers<[1], [0], [0], [1], [0, 0, 1, 1], [], []>} : vector<8x128xf32>, vector<128x12xf32>, vector<8x12xf32> -> vector<8x12xf32>
    %16 = vector.broadcast %14 : vector<1x12xf32> to vector<8x12xf32>
    %17 = arith.addf %15, %16 : vector<8x12xf32>
    %c0_10 = arith.constant 0 : index
    %c0_11 = arith.constant 0 : index
    %18 = vector.load %arg3[%c0_10, %c0_11] : memref<8x12xf32, #tpu.memory_space<vmem>>, vector<8x12xf32>
    tpu.vector_store %arg3[%c0_10, %c0_11], %17 {strides = array<i32>} : memref<8x12xf32, #tpu.memory_space<vmem>>, vector<8x12xf32>,
    return
  }
  func.func @transform_0(%arg0: i32) -> (i32, i32) {
    %c0_i32 = arith.constant 0 : i32
    %c0_i32_0 = arith.constant 0 : i32
    return %arg0, %c0_i32 : i32, i32
  }
  func.func @transform_1(%arg0: i32) -> (i32, i32) {
    %c0_i32 = arith.constant 0 : i32
    %c0_i32_0 = arith.constant 0 : i32
    %c0_i32_1 = arith.constant 0 : i32
    return %c0_i32, %c0_i32_0 : i32, i32
  }
  func.func @transform_2(%arg0: i32) -> (i32, i32) {
    %c0_i32 = arith.constant 0 : i32
    %c0_i32_0 = arith.constant 0 : i32
    return %arg0, %c0_i32 : i32, i32
  }
}

</mosaic_0001>

<llo_original>
// kernel: tpu_custom_call.1
$region0: #{tpu_custom_call.1}
  #allocation0 [shape = 'u32[]', space=smem, size = 0x4, offset = 0x4, fixed_abs, tag = 'smem constant byte address 0x4 - core index']
  #allocation1 [shape = 'u32[72,128]{1,0:T(1,128)}', space=vmem, size = 0x9000, scoped, tag = 'internal scratch']
  %s0 = inlined_call_operand.hbm [shape: f32[8,16], index: 0, kind: input, shape index: {}]
  %s1 = inlined_call_operand.hbm [shape: f32[296,128], index: 1, kind: input, shape index: {}]
  %s2 = inlined_call_operand.hbm [shape: f32[8,12], index: 2, kind: output, shape index: {}]
  %s3 = sld [smem:[#allocation0]]
  $region26: #{tpu_custom_call.1} parent=0
    _
  %s5 = ssub.s32 1, %s3
  %s6 = scalar_select 0, %s5, %s3
  $region1: #{tpu_custom_call.1} parent=0
    #allocation2 [shape = 'u8[4096]{0}', space=vmem, size = 0x1000, scoped, tag = 'input window, operand 0, single buffered']
    #allocation3 [shape = 's32[1]{0}', space=sflag, size = 0x4, scoped, tag = 'scoped memory for tpu_custom_call.1']
    #allocation4 [shape = 's32[1]{0}', space=sflag, size = 0x4, scoped, tag = 'scoped memory for tpu_custom_call.1']
    #allocation5 [shape = 'u8[151552]{0}', space=vmem, size = 0x25000, scoped, tag = 'input window, operand 1, single buffered']
    #allocation6 [shape = 's32[1]{0}', space=sflag, size = 0x4, scoped, tag = 'scoped memory for tpu_custom_call.1']
    #allocation7 [shape = 'u8[4096]{0}', space=vmem, size = 0x1000, scoped, tag = 'output window, operand 0, single buffered']
    %7 = vsyncpa [#allocation3], 0
    %8 = vsyncpa [#allocation6], 0
    %9 = vsyncpa [#allocation4], 0
    // Predicated region
    $region2: #{tpu_custom_call.1} parent=1 // pred_check
      _
    $region3: #{tpu_custom_call.1} parent=1 // pred_check_branch
      %11 = sbr.rel (0) target = $region5
    $region4: #{tpu_custom_call.1} parent=1 // pred_region
      %13 = vsyncadd [#allocation3], 0
      %s15 = sshll.u32 %s0, 4
      %s16 = int_to_ptr.hbm [resolvable:$true] %s15
      %s17 = sshll.u32 [#allocation2], 4
      %s18 = int_to_ptr.vmem [resolvable:$true] %s17
      %20 = dma.hbm_to_vmem [thread:$0]  %s16, 128, %s18, [#allocation3]
    $region5: #{tpu_custom_call.1} parent=1 // pred_fallthru
      _
    // Predicated region
    $region6: #{tpu_custom_call.1} parent=1 // pred_check
      _
    $region7: #{tpu_custom_call.1} parent=1 // pred_check_branch
      %22 = sbr.rel (0) target = $region9
    $region8: #{tpu_custom_call.1} parent=1 // pred_region
      %24 = vsyncadd [#allocation6], 0
      %s25 = sshll.u32 %s1, 4
      %s26 = int_to_ptr.hbm [resolvable:$true] %s25
      %s27 = sshll.u32 [#allocation5], 4
      %s28 = int_to_ptr.vmem [resolvable:$true] %s27
      %33 = dma.hbm_to_vmem [thread:$0]  %s26, 4736, %s28, [#allocation6], 128, 128, 8
    $region9: #{tpu_custom_call.1} parent=1 // pred_fallthru
      _
    // Predicated region
    $region10: #{tpu_custom_call.1} parent=1 // pred_check
      _
    $region11: #{tpu_custom_call.1} parent=1 // pred_check_branch
      %35 = sbr.rel (0) target = $region13
    $region12: #{tpu_custom_call.1} parent=1 // pred_region
      %37 = dma.done [#allocation3], 128
    $region13: #{tpu_custom_call.1} parent=1 // pred_fallthru
      _
    // Predicated region
    $region14: #{tpu_custom_call.1} parent=1 // pred_check
      _
    $region15: #{tpu_custom_call.1} parent=1 // pred_check_branch
      %39 = sbr.rel (0) target = $region17
    $region16: #{tpu_custom_call.1} parent=1 // pred_region
      %41 = dma.done [#allocation6], 4736
    $region17: #{tpu_custom_call.1} parent=1 // pred_fallthru
      _
    %v42 = vld [vmem:[#allocation2] sm:$0xff]
    %v43 = vld [vmem:[#allocation5] sm:$0xff]
    %v44 = vld [vmem:[#allocation5 + $0x8] sm:$0xff]
    %v45 = vld [vmem:[#allocation5 + $0x10] sm:$0x1]
    %v46 = vperm.slane %v45, 0
    %vm47 = vcmask 130048
    %v49 = vsel %vm47, %v42, 0
    %51 = vmatpush.msra.mxu0 0.0
    %52 = vmatpush.msra.mxu0 0.0
    %53 = vmatpush.msra.mxu0 0.0
    %54 = vmatpush.msra.mxu0 0.0
    %55 = vmatpush.msra.mxu0 0.0
    %56 = vmatpush.msra.mxu0 0.0
    %57 = vmatpush.msra.mxu0 0.0
    %58 = vmatpush.msra.mxu0 0.0
    %59 = vmatpush.msra.mxu0 0.0
    %60 = vmatpush.msra.mxu0 0.0
    %61 = vmatpush.msra.mxu0 0.0
    %62 = vmatpush.msra.mxu0 0.0
    %63 = vmatpush.msra.mxu0 0.0
    %64 = vmatpush.msra.mxu0 0.0
    %65 = vmatpush.msra.mxu0 %v44
    %66 = vmatpush.msra.mxu0 %v43
    %67 = vmatmul.f32.gmra.mxu0 %v49
    %v68 = vpop.f32.mrf.mxu0
    %v69 = vadd.f32 %v46, %v68
    %70 = vdwg.mxu0
    %v71 = vtanh.pop %v69
    %v72 = vld [vmem:[#allocation5 + $0x18] sm:$0xff]
    %v73 = vld [vmem:[#allocation5 + $0x20] sm:$0xff]
    %v74 = vld [vmem:[#allocation5 + $0x28] sm:$0xff]
    %v75 = vld [vmem:[#allocation5 + $0x30] sm:$0xff]
    %v76 = vld [vmem:[#allocation5 + $0x38] sm:$0xff]
    %v77 = vld [vmem:[#allocation5 + $0x40] sm:$0xff]
    %v78 = vld [vmem:[#allocation5 + $0x48] sm:$0xff]
    %v79 = vld [vmem:[#allocation5 + $0x50] sm:$0xff]
    %v80 = vld [vmem:[#allocation5 + $0x58] sm:$0xff]
    %v81 = vld [vmem:[#allocation5 + $0x60] sm:$0xff]
    %v82 = vld [vmem:[#allocation5 + $0x68] sm:$0xff]
    %v83 = vld [vmem:[#allocation5 + $0x70] sm:$0xff]
    %v84 = vld [vmem:[#allocation5 + $0x78] sm:$0xff]
    %v85 = vld [vmem:[#allocation5 + $0x80] sm:$0xff]
    %v86 = vld [vmem:[#allocation5 + $0x88] sm:$0xff]
    %v87 = vld [vmem:[#allocation5 + $0x90] sm:$0xff]
    %v88 = vld [vmem:[#allocation5 + $0x98] sm:$0x1]
    %v89 = vperm.slane %v88, 0
    %90 = vmatpush.msra.mxu0 %v87
    %91 = vmatpush.msra.mxu0 %v86
    %92 = vmatpush.msra.mxu0 %v85
    %93 = vmatpush.msra.mxu0 %v84
    %94 = vmatpush.msra.mxu0 %v83
    %95 = vmatpush.msra.mxu0 %v82
    %96 = vmatpush.msra.mxu0 %v81
    %97 = vmatpush.msra.mxu0 %v80
    %98 = vmatpush.msra.mxu0 %v79
    %99 = vmatpush.msra.mxu0 %v78
    %100 = vmatpush.msra.mxu0 %v77
    %101 = vmatpush.msra.mxu0 %v76
    %102 = vmatpush.msra.mxu0 %v75
    %103 = vmatpush.msra.mxu0 %v74
    %104 = vmatpush.msra.mxu0 %v73
    %105 = vmatpush.msra.mxu0 %v72
    %106 = vmatmul.f32.gmra.mxu0 %v71
    %v107 = vpop.f32.mrf.mxu0
    %v108 = vadd.f32 %v89, %v107
    %109 = vdwg.mxu0
    %v110 = vtanh.pop %v108
    %v111 = vld [vmem:[#allocation5 + $0xa0] sm:$0xff]
    %v112 = vld [vmem:[#allocation5 + $0xa8] sm:$0xff]
    %v113 = vld [vmem:[#allocation5 + $0xb0] sm:$0xff]
    %v114 = vld [vmem:[#allocation5 + $0xb8] sm:$0xff]
    %v115 = vld [vmem:[#allocation5 + $0xc0] sm:$0xff]
    %v116 = vld [vmem:[#allocation5 + $0xc8] sm:$0xff]
    %v117 = vld [vmem:[#allocation5 + $0xd0] sm:$0xff]
    %v118 = vld [vmem:[#allocation5 + $0xd8] sm:$0xff]
    %v119 = vld [vmem:[#allocation5 + $0xe0] sm:$0xff]
    %v120 = vld [vmem:[#allocation5 + $0xe8] sm:$0xff]
    %v121 = vld [vmem:[#allocation5 + $0xf0] sm:$0xff]
    %v122 = vld [vmem:[#allocation5 + $0xf8] sm:$0xff]
    %v123 = vld [vmem:[#allocation5 + $0x100] sm:$0xff]
    %v124 = vld [vmem:[#allocation5 + $0x108] sm:$0xff]
    %v125 = vld [vmem:[#allocation5 + $0x110] sm:$0xff]
    %v126 = vld [vmem:[#allocation5 + $0x118] sm:$0xff]
    %v127 = vld [vmem:[#allocation5 + $0x120] sm:$0x1]
    %v128 = vperm.slane %v127, 0
    %129 = vmatpush.msra.mxu0 %v126
    %130 = vmatpush.msra.mxu0 %v125
    %131 = vmatpush.msra.mxu0 %v124
    %132 = vmatpush.msra.mxu0 %v123
    %133 = vmatpush.msra.mxu0 %v122
    %134 = vmatpush.msra.mxu0 %v121
    %135 = vmatpush.msra.mxu0 %v120
    %136 = vmatpush.msra.mxu0 %v119
    %137 = vmatpush.msra.mxu0 %v118
    %138 = vmatpush.msra.mxu0 %v117
    %139 = vmatpush.msra.mxu0 %v116
    %140 = vmatpush.msra.mxu0 %v115
    %141 = vmatpush.msra.mxu0 %v114
    %142 = vmatpush.msra.mxu0 %v113
    %143 = vmatpush.msra.mxu0 %v112
    %144 = vmatpush.msra.mxu0 %v111
    %145 = vmatmul.f32.gmra.mxu0 %v110
    %v146 = vpop.f32.mrf.mxu0
    %v147 = vadd.f32 %v128, %v146
    %148 = vdwg.mxu0
    %vm149 = vcmask 97280
    %150 = vst.msk [vmem:[#allocation7] sm:$0xff] %vm149, %v147
    // Predicated region
    $region18: #{tpu_custom_call.1} parent=1 // pred_check
      _
    $region19: #{tpu_custom_call.1} parent=1 // pred_check_branch
      %152 = sbr.rel (0) target = $region21
    $region20: #{tpu_custom_call.1} parent=1 // pred_region
      %154 = vsyncadd [#allocation4], 0
      %s156 = sshll.u32 [#allocation7], 4
      %s157 = int_to_ptr.vmem [resolvable:$true] %s156
      %s158 = sshll.u32 %s2, 4
      %s159 = int_to_ptr.hbm [resolvable:$true] %s158
      %161 = dma.vmem_to_hbm [thread:$0]  %s157, 128, %s159, [#allocation4]
    $region21: #{tpu_custom_call.1} parent=1 // pred_fallthru
      _
    // Predicated region
    $region22: #{tpu_custom_call.1} parent=1 // pred_check
      _
    $region23: #{tpu_custom_call.1} parent=1 // pred_check_branch
      %163 = sbr.rel (0) target = $region25
    $region24: #{tpu_custom_call.1} parent=1 // pred_region
      %165 = dma.done [#allocation4], 128
    $region25: #{tpu_custom_call.1} parent=1 // pred_fallthru
      _
    %166 = vsyncpa [#allocation3], 1
    %167 = vsyncpa [#allocation6], 1
    %168 = vsyncpa [#allocation4], 1

</llo_original>
